<compile_context>
chip_gen: v6e
topology: v6e:2x2x1
jax: 0.10.0
libtpu: 0.0.40
codegen_flags: <defaults>
</compile_context>

<pallas_src>
import jax
import jax.numpy as jnp
import numpy as np
from jax.experimental import pallas as pl
from jax.experimental.pallas import tpu as pltpu

NEG_SLOPE = 0.01  # nn.LeakyReLU default negative slope


def _round_up(x, m):
    return ((x + m - 1) // m) * m


def _shared_conv_kernel(lens_ref,                  # SMEM (B,) int32 (scalar prefetch)
                        x_ref, halo_ref,           # VMEM (1, tl, wDx), (1, 8, wDx)
                        w0_ref, w1_ref, bc_ref,    # conv tap weights + bias
                        wfh_ref, wfw_ref, bf_ref,  # fc weight halves + bias
                        out_ref):                  # VMEM (1, tl, hDp)
    b = pl.program_id(0)
    j = pl.program_id(1)

    x = x_ref[0]                      # (tl, wDx): rows [j*tl, j*tl + tl) of batch b
    tl = x.shape[0]

    # Partial products of the k=2 conv (f32 accumulation on the MXU).
    xw0 = jnp.dot(x, w0_ref[...], preferred_element_type=jnp.float32)   # tap0 on x[t]
    xw1 = jnp.dot(x, w1_ref[...], preferred_element_type=jnp.float32)   # tap1 on x[t]

    # Conv1d(..., 2, padding=1)[:, :, :-1] needs tap0 applied to x[t-1].  Roll the f32
    # partial product one sublane down (XLU) and patch row 0 with the halo row (last
    # row of the previous tile), zeroed for the first tile (== conv left zero-pad).
    hr = halo_ref.shape[1]
    prev = halo_ref[0][hr - 1:hr, :]                                        # (1, wDx)
    prev0 = jnp.dot(prev, w0_ref[...], preferred_element_type=jnp.float32)  # (1, hDp)
    prev0 = jnp.where(j == 0, jnp.zeros_like(prev0), prev0)
    row = jax.lax.broadcasted_iota(jnp.int32, (tl, 1), 0)                   # (tl, 1)
    shifted = jnp.where(row == 0, prev0, pltpu.roll(xw0, shift=1, axis=0))

    conv = shifted + xw1 + bc_ref[...]
    h = jnp.where(conv >= 0, conv, NEG_SLOPE * conv)                        # LeakyReLU

    # Linear(word_dim + hidden_dim, hidden_dim) on concat([h, x], -1) == split matmuls.
    fc = (jnp.dot(h.astype(wfh_ref.dtype), wfh_ref[...],
                  preferred_element_type=jnp.float32)
          + jnp.dot(x, wfw_ref[...], preferred_element_type=jnp.float32)
          + bf_ref[...])
    act = jnp.where(fc >= 0, fc, NEG_SLOPE * fc)                            # LeakyReLU

    # Length mask from scalar-prefetched lengths; (tl, 1) column broadcast in the
    # select.  Also zeroes any garbage tail rows of a partial last L tile.
    length = lens_ref[b]
    pos = j * tl + row
    out_ref[0] = jnp.where(pos < length, act, 0.0).astype(out_ref.dtype)


def shared_conv_forward(text, text_lengths, params, *, tile_l=512,
                        compute_dtype=jnp.bfloat16, out_dtype=None):
    """Fused SharedConv forward.

    text: (B, L, word_dim); text_lengths: length-B sequence of ints.
    tile_l: rows of L per grid step (forced to a multiple of 8, capped at L).
    compute_dtype: dtype of the activation/weight HBM streams (MXU accumulation is
      always f32).  Pass jnp.float32 for exact f32 math.
    out_dtype: kernel output dtype (default: compute_dtype).  The hidden dim is padded
      to a multiple of 128 internally; if hidden_dim is already a multiple of 128 no
      post-kernel slice (extra HBM pass) is needed.
    """
    B, L, wD = text.shape
    hD = params["conv_b"].shape[0]
    compute_dtype = np.dtype(compute_dtype if compute_dtype is not None
                             else text.dtype)
    out_dtype = np.dtype(out_dtype if out_dtype is not None else compute_dtype)

    lengths = jnp.asarray(text_lengths, dtype=jnp.int32)                    # (B,)
    mask = (jnp.arange(L)[None, :] < lengths[:, None]).astype(text.dtype)   # (B, L)

    hDp = _round_up(hD, 128)          # lane-dense output / hidden intermediates
    wDp = _round_up(wD, 128)
    # Pad word_dim to a lane-dense multiple of 128 only when the blowup is small
    # (e.g. 300 -> 384); for tiny word dims the extra HBM bytes cost more than the
    # lane-sparse loads (a full-extent last block dim is still legal).
    pad_wd = (wDp != wD) and (3 * (wDp - wD) <= wD)
    wDx = wDp if pad_wd else wD

    # --- L tiling: tl multiple of 8 and <= floor(L/8)*8 so every block starts in
    # bounds; ragged last tiles use Pallas partial blocks + the in-kernel mask.
    x = text
    if L >= 8:
        tl_cap = (L // 8) * 8
        tl = max(8, min(_round_up(int(tile_l), 8), tl_cap))
        if B == 1 and pl.cdiv(L, tl) == 1 and tl > 8:
            # v7x megacore: make sure both TensorCores get at least one grid step.
            tl = min(tl_cap, max(8, _round_up(pl.cdiv(L, 2), 8)))
        Lk = L
    else:                              # degenerate tiny-L case: one 8-row tile
        tl, Lk = 8, 8
        x = jnp.pad(x, ((0, 0), (0, 8 - L), (0, 0)))
    assert tl % 8 == 0
    num_l = pl.cdiv(Lk, tl)
    hblk = tl // 8                     # halo blocks are 8 rows along L

    # Present the kernel with a compute_dtype (and, if enabled, lane-dense) input.
    # At most one fused cast+pad pass; it disappears when the caller already supplies
    # compute_dtype inputs and word_dim needs no padding.
    if x.dtype != compute_dtype:
        x = x.astype(compute_dtype)
    if wDx != wD:
        x = jnp.pad(x, ((0, 0), (0, 0), (0, wDx - wD)))

    # --- parameters: split conv taps / fc halves, transpose for right-multiplication,
    # zero-pad to (wDx, hDp) / (hDp, hDp) (zero padding keeps numerics unchanged).
    # Biases stay f32 (added after f32 accumulation).
    wdt = compute_dtype

    def pad2(a, rows, cols):
        return jnp.pad(a, ((0, rows - a.shape[0]), (0, cols - a.shape[1])))

    w0 = pad2(params["conv_w"][:, :, 0].T, wDx, hDp).astype(wdt)       # (wDx, hDp)
    w1 = pad2(params["conv_w"][:, :, 1].T, wDx, hDp).astype(wdt)       # (wDx, hDp)
    bc = pad2(params["conv_b"][None, :], 1, hDp).astype(jnp.float32)   # (1, hDp)
    wfh = pad2(params["fc_w"][:, :hD].T, hDp, hDp).astype(wdt)         # (hDp, hDp)
    wfw = pad2(params["fc_w"][:, hD:].T, wDx, hDp).astype(wdt)         # (wDx, hDp)
    bf = pad2(params["fc_b"][None, :], 1, hDp).astype(jnp.float32)     # (1, hDp)

    def wspec(shape):
        return pl.BlockSpec(shape, lambda b, j, lens: (0, 0))

    grid_spec = pltpu.PrefetchScalarGridSpec(
        num_scalar_prefetch=1,
        grid=(B, num_l),
        in_specs=[
            # main text tile for this (batch, L-tile)
            pl.BlockSpec((1, tl, wDx), lambda b, j, lens: (b, j, 0)),
            # 8-row halo whose last row is row j*tl - 1 (clamped / zeroed for j == 0)
            pl.BlockSpec((1, 8, wDx),
                         lambda b, j, lens: (b, jnp.maximum(j * hblk - 1, 0), 0)),
            wspec((wDx, hDp)), wspec((wDx, hDp)), wspec((1, hDp)),
            wspec((hDp, hDp)), wspec((wDx, hDp)), wspec((1, hDp)),
        ],
        out_specs=pl.BlockSpec((1, tl, hDp), lambda b, j, lens: (b, j, 0)),
    )

    # Explicit VMEM budget: double-buffered x/halo/out tiles + weights (upper bound),
    # floored at 32 MiB (v5e's default scoped limit is only 16 MiB).  On v7x (64 MiB
    # physical per TC) keep tile_l so this estimate stays under ~48 MiB.
    itm = compute_dtype.itemsize
    otm = out_dtype.itemsize
    w_bytes = (3 * wDx * hDp + hDp * hDp) * itm + 2 * hDp * 4
    tile_bytes = (tl + 8) * wDx * itm + tl * hDp * otm
    vmem_limit = int(min(max(32 << 20, 2 * (tile_bytes + w_bytes) + (4 << 20)),
                         100 << 20))

    flops = 2 * B * Lk * (3 * wDx * hDp + hDp * hDp)
    bytes_accessed = (B * Lk * wDx * itm + B * num_l * 8 * wDx * itm
                      + w_bytes + B * Lk * hDp * otm)

    out = pl.pallas_call(
        _shared_conv_kernel,
        out_shape=jax.ShapeDtypeStruct((B, Lk, hDp), out_dtype),
        grid_spec=grid_spec,
        compiler_params=pltpu.CompilerParams(
            dimension_semantics=("parallel", "parallel"),
            vmem_limit_bytes=vmem_limit),
        cost_estimate=pl.CostEstimate(flops=int(flops), transcendentals=0,
                                      bytes_accessed=int(bytes_accessed)),
    )(lengths, x, x, w0, w1, bc, wfh, wfw, bf)

    # Slice only when padding forced it (typical hidden_dim % 128 == 0 => no copy).
    con_feat = out if (Lk == L and hDp == hD) else out[:, :L, :hD]
    return con_feat, mask


def init_params(key, word_dim, hidden_dim):
    k1, k2, k3, k4 = jax.random.split(key, 4)
    scale_c = 1.0 / jnp.sqrt(word_dim * 2.0)
    scale_f = 1.0 / jnp.sqrt(float(word_dim + hidden_dim))
    return {
        "conv_w": jax.random.uniform(k1, (hidden_dim, word_dim, 2),
                                     minval=-scale_c, maxval=scale_c,
                                     dtype=jnp.float32),
        "conv_b": jax.random.uniform(k2, (hidden_dim,),
                                     minval=-scale_c, maxval=scale_c,
                                     dtype=jnp.float32),
        "fc_w": jax.random.uniform(k3, (hidden_dim, word_dim + hidden_dim),
                                   minval=-scale_f, maxval=scale_f,
                                   dtype=jnp.float32),
        "fc_b": jax.random.uniform(k4, (hidden_dim,),
                                   minval=-scale_f, maxval=scale_f,
                                   dtype=jnp.float32),
    }


def _reference(text, text_lengths, params):
    """Pure-JAX reference matching the PyTorch forward (eval mode)."""
    B, L, wD = text.shape
    lengths = jnp.asarray(text_lengths, dtype=jnp.int32)
    mask = (jnp.arange(L)[None, :] < lengths[:, None]).astype(text.dtype)
    xs = jnp.pad(text, ((0, 0), (1, 0), (0, 0)))[:, :L, :]
    conv = (jnp.einsum("blw,hw->blh", xs, params["conv_w"][:, :, 0])
            + jnp.einsum("blw,hw->blh", text, params["conv_w"][:, :, 1])
            + params["conv_b"])
    conv = jnp.where(conv >= 0, conv, NEG_SLOPE * conv)
    cat = jnp.concatenate([conv, text], axis=-1)
    fc = jnp.einsum("blc,hc->blh", cat, params["fc_w"]) + params["fc_b"]
    fc = jnp.where(fc >= 0, fc, NEG_SLOPE * fc)
    return fc * mask[..., None], mask


if __name__ == "__main__":
    B, L, wD, hD = 2, 8, 32, 32
    key = jax.random.PRNGKey(0)
    k_text, k_params = jax.random.split(key)
    text = jax.random.normal(k_text, (B, L, wD), dtype=jnp.float32)
    text_lengths = [8, 5]
    params = init_params(k_params, wD, hD)

    ref_feat, ref_mask = _reference(text, text_lengths, params)

    # Default path: bf16 compute + bf16 output (mem-bound HBM savings).
    con_feat, mask = shared_conv_forward(text, text_lengths, params)
    con_feat = jax.block_until_ready(con_feat)
    mask = jax.block_until_ready(mask)
    assert con_feat.shape == (B, L, hD) and mask.shape == (B, L)
    assert con_feat.dtype == jnp.bfloat16
    assert jnp.allclose(con_feat.astype(jnp.float32), ref_feat, atol=5e-2, rtol=5e-2)
    assert jnp.allclose(mask, ref_mask)

    # Exact f32 path (tight tolerance) pins down the halo/roll/mask logic exactly.
    feat32, _ = shared_conv_forward(text, text_lengths, params,
                                    compute_dtype=jnp.float32,
                                    out_dtype=jnp.float32)
    feat32 = jax.block_until_ready(feat32)
    assert jnp.allclose(feat32, ref_feat, atol=1e-5, rtol=1e-5)

    # Multi-tile ragged path: exercises the cross-tile halo roll and the partial last
    # L block (no wrapper-side L padding).
    L2 = 21
    text2 = jax.random.normal(jax.random.PRNGKey(1), (B, L2, wD), dtype=jnp.float32)
    lengths2 = [21, 13]
    ref2, _ = _reference(text2, lengths2, params)
    feat2, _ = shared_conv_forward(text2, lengths2, params, tile_l=8,
                                   compute_dtype=jnp.float32, out_dtype=jnp.float32)
    feat2 = jax.block_until_ready(feat2)
    assert feat2.shape == (B, L2, hD)
    assert jnp.allclose(feat2, ref2, atol=1e-5, rtol=1e-5)

    # Same ragged case on the default bf16 path (2 tiles of 16 rows, last one partial).
    feat2_bf16, _ = shared_conv_forward(text2, lengths2, params, tile_l=16)
    feat2_bf16 = jax.block_until_ready(feat2_bf16)
    assert jnp.allclose(feat2_bf16.astype(jnp.float32), ref2, atol=5e-2, rtol=5e-2)

    print("KERNEL_OK")
</pallas_src>

<mosaic_0001>
module attributes {stable_mosaic.version = 11 : i64} {
  func.func @_shared_conv_kernel(%arg0: i32, %arg1: i32, %arg2: memref<2xi32, #tpu.memory_space<smem>>, %arg3: memref<1x8x32xbf16, #tpu.memory_space<vmem>>, %arg4: memref<1x8x32xbf16, #tpu.memory_space<vmem>>, %arg5: memref<32x128xbf16, #tpu.memory_space<vmem>>, %arg6: memref<32x128xbf16, #tpu.memory_space<vmem>>, %arg7: memref<1x128xf32, #tpu.memory_space<vmem>>, %arg8: memref<128x128xbf16, #tpu.memory_space<vmem>>, %arg9: memref<32x128xbf16, #tpu.memory_space<vmem>>, %arg10: memref<1x128xf32, #tpu.memory_space<vmem>>, %arg11: memref<1x8x128xbf16, #tpu.memory_space<vmem>>) attributes {dimension_semantics = [#tpu.dimension_semantics<parallel>, #tpu.dimension_semantics<parallel>], iteration_bounds = array<i64: 2, 1>, scalar_prefetch = 1 : i64, scratch_operands = 0 : i64, tpu.core_type = #tpu.core_type<tc>, window_params = [{transform_indices = @transform_0, window_bounds = array<i64: 1, 8, 32>}, {transform_indices = @transform_1, window_bounds = array<i64: 1, 8, 32>}, {pipeline_mode = #tpu.pipeline_mode<synchronous>, transform_indices = @transform_2, window_bounds = array<i64: 32, 128>}, {pipeline_mode = #tpu.pipeline_mode<synchronous>, transform_indices = @transform_3, window_bounds = array<i64: 32, 128>}, {pipeline_mode = #tpu.pipeline_mode<synchronous>, transform_indices = @transform_4, window_bounds = array<i64: 1, 128>}, {pipeline_mode = #tpu.pipeline_mode<synchronous>, transform_indices = @transform_5, window_bounds = array<i64: 128, 128>}, {pipeline_mode = #tpu.pipeline_mode<synchronous>, transform_indices = @transform_6, window_bounds = array<i64: 32, 128>}, {pipeline_mode = #tpu.pipeline_mode<synchronous>, transform_indices = @transform_7, window_bounds = array<i64: 1, 128>}, {transform_indices = @transform_8, window_bounds = array<i64: 1, 8, 128>}]} {
    %c0 = arith.constant 0 : index
    %c0_0 = arith.constant 0 : index
    %c0_1 = arith.constant 0 : index
    %0 = vector.load %arg3[%c0, %c0_0, %c0_1] : memref<1x8x32xbf16, #tpu.memory_space<vmem>>, vector<1x8x32xbf16>
    %1 = vector.shape_cast %0 : vector<1x8x32xbf16> to vector<8x32xbf16>
    %c0_2 = arith.constant 0 : index
    %c0_3 = arith.constant 0 : index
    %2 = vector.load %arg5[%c0_2, %c0_3] : memref<32x128xbf16, #tpu.memory_space<vmem>>, vector<32x128xbf16>
    %cst = arith.constant dense<0.000000e+00> : vector<8x128xf32>
    %3 = tpu.matmul %1, %2, %cst {dimension_numbers = #tpu.dot_dimension_numbers<[1], [0], [0], [1], [0, 0, 1, 1], [], []>} : vector<8x32xbf16>, vector<32x128xbf16>, vector<8x128xf32> -> vector<8x128xf32>
    %c0_4 = arith.constant 0 : index
    %c0_5 = arith.constant 0 : index
    %4 = vector.load %arg6[%c0_4, %c0_5] : memref<32x128xbf16, #tpu.memory_space<vmem>>, vector<32x128xbf16>
    %cst_6 = arith.constant dense<0.000000e+00> : vector<8x128xf32>
    %5 = tpu.matmul %1, %4, %cst_6 {dimension_numbers = #tpu.dot_dimension_numbers<[1], [0], [0], [1], [0, 0, 1, 1], [], []>} : vector<8x32xbf16>, vector<32x128xbf16>, vector<8x128xf32> -> vector<8x128xf32>
    %c0_7 = arith.constant 0 : index
    %c0_8 = arith.constant 0 : index
    %c0_9 = arith.constant 0 : index
    %6 = vector.load %arg4[%c0_7, %c0_8, %c0_9] : memref<1x8x32xbf16, #tpu.memory_space<vmem>>, vector<1x8x32xbf16>
    %7 = vector.shape_cast %6 : vector<1x8x32xbf16> to vector<8x32xbf16>
    %8 = vector.extract_strided_slice %7 {offsets = [7, 0], sizes = [1, 32], strides = [1, 1]} : vector<8x32xbf16> to vector<1x32xbf16>
    %c0_10 = arith.constant 0 : index
    %c0_11 = arith.constant 0 : index
    %9 = vector.load %arg5[%c0_10, %c0_11] : memref<32x128xbf16, #tpu.memory_space<vmem>>, vector<32x128xbf16>
    %cst_12 = arith.constant dense<0.000000e+00> : vector<1x128xf32>
    %10 = tpu.matmul %8, %9, %cst_12 {dimension_numbers = #tpu.dot_dimension_numbers<[1], [0], [0], [1], [0, 0, 1, 1], [], []>} : vector<1x32xbf16>, vector<32x128xbf16>, vector<1x128xf32> -> vector<1x128xf32>
    %c0_i32 = arith.constant 0 : i32
    %11 = arith.cmpi eq, %arg1, %c0_i32 : i32
    %cst_13 = arith.constant 0.000000e+00 : f32
    %12 = vector.broadcast %cst_13 : f32 to vector<1x128xf32>
    %13 = arith.select %11, %12, %10 : vector<1x128xf32>
    %14 = tpu.iota {dimensions = array<i32: 0>} : vector<8x1xi32>
    %c0_i32_14 = arith.constant 0 : i32
    %15 = vector.broadcast %c0_i32_14 : i32 to vector<8x1xi32>
    %16 = arith.cmpi eq, %14, %15 : vector<8x1xi32>
    %c1_i32 = arith.constant 1 : i32
    %17 = tpu.dynamic_rotate %3 by %c1_i32 dim 0 : vector<8x128xf32>, i32 -> vector<8x128xf32>
    %18 = vector.shape_cast %16 : vector<8x1xi1> to vector<8x1xi1>
    %19 = vector.broadcast %18 : vector<8x1xi1> to vector<8x128xi1>
    %20 = vector.shape_cast %13 : vector<1x128xf32> to vector<1x128xf32>
    %21 = vector.broadcast %20 : vector<1x128xf32> to vector<8x128xf32>
    %22 = arith.select %19, %21, %17 : vector<8x128xi1>, vector<8x128xf32>
    %23 = arith.addf %22, %5 : vector<8x128xf32>
    %c0_15 = arith.constant 0 : index
    %c0_16 = arith.constant 0 : index
    %24 = vector.load %arg7[%c0_15, %c0_16] : memref<1x128xf32, #tpu.memory_space<vmem>>, vector<1x128xf32>
    %25 = vector.broadcast %24 : vector<1x128xf32> to vector<8x128xf32>
    %26 = arith.addf %23, %25 : vector<8x128xf32>
    %cst_17 = arith.constant 0.000000e+00 : f32
    %27 = vector.broadcast %cst_17 : f32 to vector<8x128xf32>
    %28 = arith.cmpf oge, %26, %27 : vector<8x128xf32>
    %cst_18 = arith.constant 0.00999999977 : f32
    %29 = vector.broadcast %cst_18 : f32 to vector<8x128xf32>
    %30 = arith.mulf %29, %26 : vector<8x128xf32>
    %31 = arith.select %28, %26, %30 : vector<8x128xi1>, vector<8x128xf32>
    %32 = arith.truncf %31 : vector<8x128xf32> to vector<8x128xbf16>
    %c0_19 = arith.constant 0 : index
    %c0_20 = arith.constant 0 : index
    %33 = vector.load %arg8[%c0_19, %c0_20] : memref<128x128xbf16, #tpu.memory_space<vmem>>, vector<128x128xbf16>
    %cst_21 = arith.constant dense<0.000000e+00> : vector<8x128xf32>
    %34 = tpu.matmul %32, %33, %cst_21 {dimension_numbers = #tpu.dot_dimension_numbers<[1], [0], [0], [1], [0, 0, 1, 1], [], []>} : vector<8x128xbf16>, vector<128x128xbf16>, vector<8x128xf32> -> vector<8x128xf32>
    %c0_22 = arith.constant 0 : index
    %c0_23 = arith.constant 0 : index
    %35 = vector.load %arg9[%c0_22, %c0_23] : memref<32x128xbf16, #tpu.memory_space<vmem>>, vector<32x128xbf16>
    %cst_24 = arith.constant dense<0.000000e+00> : vector<8x128xf32>
    %36 = tpu.matmul %1, %35, %cst_24 {dimension_numbers = #tpu.dot_dimension_numbers<[1], [0], [0], [1], [0, 0, 1, 1], [], []>} : vector<8x32xbf16>, vector<32x128xbf16>, vector<8x128xf32> -> vector<8x128xf32>
    %37 = arith.addf %34, %36 : vector<8x128xf32>
    %c0_25 = arith.constant 0 : index
    %c0_26 = arith.constant 0 : index
    %38 = vector.load %arg10[%c0_25, %c0_26] : memref<1x128xf32, #tpu.memory_space<vmem>>, vector<1x128xf32>
    %39 = vector.broadcast %38 : vector<1x128xf32> to vector<8x128xf32>
    %40 = arith.addf %37, %39 : vector<8x128xf32>
    %cst_27 = arith.constant 0.000000e+00 : f32
    %41 = vector.broadcast %cst_27 : f32 to vector<8x128xf32>
    %42 = arith.cmpf oge, %40, %41 : vector<8x128xf32>
    %cst_28 = arith.constant 0.00999999977 : f32
    %43 = vector.broadcast %cst_28 : f32 to vector<8x128xf32>
    %44 = arith.mulf %43, %40 : vector<8x128xf32>
    %45 = arith.select %42, %40, %44 : vector<8x128xi1>, vector<8x128xf32>
    %46 = arith.index_cast %arg0 : i32 to index
    %47 = memref.load %arg2[%46] : memref<2xi32, #tpu.memory_space<smem>>
    %c8_i32 = arith.constant 8 : i32
    %48 = arith.muli %arg1, %c8_i32 : i32
    %49 = vector.broadcast %48 : i32 to vector<8x1xi32>
    %50 = arith.addi %49, %14 : vector<8x1xi32>
    %51 = vector.broadcast %47 : i32 to vector<8x1xi32>
    %52 = arith.cmpi slt, %50, %51 : vector<8x1xi32>
    %cst_29 = arith.constant 0.000000e+00 : f32
    %53 = vector.shape_cast %52 : vector<8x1xi1> to vector<8x1xi1>
    %54 = vector.broadcast %53 : vector<8x1xi1> to vector<8x128xi1>
    %55 = vector.broadcast %cst_29 : f32 to vector<8x128xf32>
    %56 = arith.select %54, %45, %55 : vector<8x128xi1>, vector<8x128xf32>
    %57 = arith.truncf %56 : vector<8x128xf32> to vector<8x128xbf16>
    %c0_30 = arith.constant 0 : index
    %c0_31 = arith.constant 0 : index
    %c0_32 = arith.constant 0 : index
    %58 = vector.load %arg11[%c0_30, %c0_31, %c0_32] : memref<1x8x128xbf16, #tpu.memory_space<vmem>>, vector<1x8x128xbf16>
    %59 = vector.shape_cast %58 : vector<1x8x128xbf16> to vector<8x128xbf16>
    %60 = vector.shape_cast %57 : vector<8x128xbf16> to vector<1x8x128xbf16>
    tpu.vector_store %arg11[%c0_30, %c0_31, %c0_32], %60 {strides = array<i32>} : memref<1x8x128xbf16, #tpu.memory_space<vmem>>, vector<1x8x128xbf16>,
    return
  }
  func.func @transform_0(%arg0: i32, %arg1: i32, %arg2: memref<2xi32, #tpu.memory_space<smem>>) -> (i32, i32, i32) {
    %c0_i32 = arith.constant 0 : i32
    %c0_i32_0 = arith.constant 0 : i32
    return %arg0, %arg1, %c0_i32 : i32, i32, i32
  }
  func.func @transform_1(%arg0: i32, %arg1: i32, %arg2: memref<2xi32, #tpu.memory_space<smem>>) -> (i32, i32, i32) {
    %c1_i32 = arith.constant 1 : i32
    %0 = arith.muli %arg1, %c1_i32 : i32
    %c1_i32_0 = arith.constant 1 : i32
    %1 = arith.subi %0, %c1_i32_0 : i32
    %c0_i32 = arith.constant 0 : i32
    %2 = arith.maxsi %1, %c0_i32 : i32
    %c0_i32_1 = arith.constant 0 : i32
    %c0_i32_2 = arith.constant 0 : i32
    return %arg0, %2, %c0_i32_1 : i32, i32, i32
  }
  func.func @transform_2(%arg0: i32, %arg1: i32, %arg2: memref<2xi32, #tpu.memory_space<smem>>) -> (i32, i32) {
    %c0_i32 = arith.constant 0 : i32
    %c0_i32_0 = arith.constant 0 : i32
    %c0_i32_1 = arith.constant 0 : i32
    return %c0_i32, %c0_i32_0 : i32, i32
  }
  func.func @transform_3(%arg0: i32, %arg1: i32, %arg2: memref<2xi32, #tpu.memory_space<smem>>) -> (i32, i32) {
    %c0_i32 = arith.constant 0 : i32
    %c0_i32_0 = arith.constant 0 : i32
    %c0_i32_1 = arith.constant 0 : i32
    return %c0_i32, %c0_i32_0 : i32, i32
  }
  func.func @transform_4(%arg0: i32, %arg1: i32, %arg2: memref<2xi32, #tpu.memory_space<smem>>) -> (i32, i32) {
    %c0_i32 = arith.constant 0 : i32
    %c0_i32_0 = arith.constant 0 : i32
    %c0_i32_1 = arith.constant 0 : i32
    return %c0_i32, %c0_i32_0 : i32, i32
  }
  func.func @transform_5(%arg0: i32, %arg1: i32, %arg2: memref<2xi32, #tpu.memory_space<smem>>) -> (i32, i32) {
    %c0_i32 = arith.constant 0 : i32
    %c0_i32_0 = arith.constant 0 : i32
    %c0_i32_1 = arith.constant 0 : i32
    return %c0_i32, %c0_i32_0 : i32, i32
  }
  func.func @transform_6(%arg0: i32, %arg1: i32, %arg2: memref<2xi32, #tpu.memory_space<smem>>) -> (i32, i32) {
    %c0_i32 = arith.constant 0 : i32
    %c0_i32_0 = arith.constant 0 : i32
    %c0_i32_1 = arith.constant 0 : i32
    return %c0_i32, %c0_i32_0 : i32, i32
  }
  func.func @transform_7(%arg0: i32, %arg1: i32, %arg2: memref<2xi32, #tpu.memory_space<smem>>) -> (i32, i32) {
    %c0_i32 = arith.constant 0 : i32
    %c0_i32_0 = arith.constant 0 : i32
    %c0_i32_1 = arith.constant 0 : i32
    return %c0_i32, %c0_i32_0 : i32, i32
  }
  func.func @transform_8(%arg0: i32, %arg1: i32, %arg2: memref<2xi32, #tpu.memory_space<smem>>) -> (i32, i32, i32) {
    %c0_i32 = arith.constant 0 : i32
    %c0_i32_0 = arith.constant 0 : i32
    return %arg0, %arg1, %c0_i32 : i32, i32, i32
  }
}

</mosaic_0001>

<llo_original>
// kernel: tpu_custom_call.1
$region0: #{tpu_custom_call.1}
  #allocation0 [shape = 'u32[]', space=smem, size = 0x4, offset = 0x4, fixed_abs, tag = 'smem constant byte address 0x4 - core index']
  #allocation1 [shape = 'u32[144,128]{1,0:T(1,128)}', space=vmem, size = 0x12000, scoped, tag = 'internal scratch']
  #allocation2 [shape = 's32[1]{0}', space=sflag, size = 0x4, scoped, tag = 'scoped memory for tpu_custom_call.1']
  #allocation3 [shape = 'u8[512]{0}', space=smem, size = 0x200, scoped, tag = 'prefetched SMEM operand 0']
  %s0 = inlined_call_operand.hbm [shape: s32[2], index: 0, kind: input, shape index: {}]
  %s1 = inlined_call_operand.hbm [shape: bf16[2,8,32], index: 1, kind: input, shape index: {}]
  %s2 = inlined_call_operand.hbm [shape: bf16[2,8,32], index: 2, kind: input, shape index: {}]
  %s3 = inlined_call_operand.hbm [shape: bf16[32,128], index: 3, kind: input, shape index: {}]
  %s4 = inlined_call_operand.hbm [shape: bf16[32,128], index: 4, kind: input, shape index: {}]
  %s5 = inlined_call_operand.vmem [shape: f32[1,128], index: 5, kind: input, shape index: {}]
  %s6 = inlined_call_operand.hbm [shape: bf16[128,128], index: 6, kind: input, shape index: {}]
  %s7 = inlined_call_operand.hbm [shape: bf16[32,128], index: 7, kind: input, shape index: {}]
  %s8 = inlined_call_operand.vmem [shape: f32[1,128], index: 8, kind: input, shape index: {}]
  %s9 = inlined_call_operand.hbm [shape: bf16[2,8,128], index: 9, kind: output, shape index: {}]
  %s10 = sld [smem:[#allocation0]]
  $region89: #{tpu_custom_call.1} parent=0
    _
  %s12 = ssub.s32 1, %s10
  %s13 = scalar_select 0, %s12, %s10
  %15 = dma.hbm_to_smem %s0, 16, [#allocation3], [#allocation2]
  %16 = dma.done [#allocation2], 16
  %17 = sfence
  $region1: #{tpu_custom_call.1} parent=0
    #allocation4 [shape = 'u8[4096]{0}', space=vmem, size = 0x1000, scoped, tag = 'input window, operand 1']
    #allocation5 [shape = 's32[2]{0}', space=sflag, size = 0x8, scoped, tag = 'scoped memory for tpu_custom_call.1']
    #allocation6 [shape = 's32[2]{0}', space=sflag, size = 0x8, scoped, tag = 'scoped memory for tpu_custom_call.1']
    #allocation7 [shape = 'u8[4096]{0}', space=vmem, size = 0x1000, scoped, tag = 'input window, operand 2']
    #allocation8 [shape = 's32[2]{0}', space=sflag, size = 0x8, scoped, tag = 'scoped memory for tpu_custom_call.1']
    #allocation9 [shape = 'u8[8192]{0}', space=vmem, size = 0x2000, scoped, tag = 'input window, operand 3, single buffered']
    #allocation10 [shape = 'u8[8192]{0}', space=vmem, size = 0x2000, scoped, tag = 'input window, operand 4, single buffered']
    #allocation11 [shape = 's32[1]{0}', space=sflag, size = 0x4, scoped, tag = 'scoped memory for tpu_custom_call.1']
    #allocation12 [shape = 'u8[32768]{0}', space=vmem, size = 0x8000, scoped, tag = 'input window, operand 6, single buffered']
    #allocation13 [shape = 'u8[8192]{0}', space=vmem, size = 0x2000, scoped, tag = 'input window, operand 7, single buffered']
    #allocation14 [shape = 's32[1]{0}', space=sflag, size = 0x4, scoped, tag = 'scoped memory for tpu_custom_call.1']
    #allocation15 [shape = 'u8[4096]{0}', space=vmem, size = 0x1000, scoped, tag = 'output window, operand 0']
    %18 = vsyncpa [#allocation5], 0
    %s19 = scalar_lea.sflag [#allocation5], 1
    %20 = vsyncpa %s19, 0
    %21 = vsyncpa [#allocation8], 0
    %s22 = scalar_lea.sflag [#allocation8], 1
    %23 = vsyncpa %s22, 0
    %24 = vsyncpa [#allocation11], 0
    %25 = vsyncpa [#allocation14], 0
    %26 = vsyncpa [#allocation6], 0
    %s27 = scalar_lea.sflag [#allocation6], 1
    %28 = vsyncpa %s27, 0
    loop: start=0, step=1, limit=4
    $region2: #{tpu_custom_call.1} parent=1 // loop_pre_header
      _
    $region3: #{tpu_custom_call.1} parent=1 // loop_header
      %s30 = sphi 0, %s34
      %p31 = scmp.ge.s32.totalorder %s30, 4
      %s37 = sphi 0, %s49
      %s38 = sphi 0, %s45
      %s39 = sphi 0, %s37
      %s40 = sphi 0, %s38
      %s41 = sphi 0, %s39
      %s42 = sphi 0, %s40
      %s54 = sphi 0, %s56
      %s57 = sphi 0, %s54
      %s58 = sphi 0, %s57
      %s74 = sphi 0, %s58
      %s88 = sphi 0, %s90
      %s91 = sphi 0, %s88
      %s92 = sphi 0, %s91
      %s108 = sphi 0, %s92
      %s112 = sphi 0, %s112
      %s114 = sphi 0, %s112
      %s115 = sphi 0, %s114
      %s129 = sphi 0, %s115
      %s133 = sphi 0, %s133
      %s135 = sphi 0, %s133
      %s136 = sphi 0, %s135
      %s150 = sphi 0, %s136
      %s154 = sphi 0, %s154
      %s156 = sphi 0, %s154
      %s157 = sphi 0, %s156
      %s171 = sphi 0, %s157
      %s175 = sphi 0, %s175
      %s177 = sphi 0, %s175
      %s178 = sphi 0, %s177
      %s192 = sphi 0, %s178
      %s196 = sphi 0, %s196
      %s198 = sphi 0, %s196
      %s199 = sphi 0, %s198
      %s213 = sphi 0, %s199
      %s217 = sphi 0, %s217
      %s219 = sphi 0, %s217
      %s220 = sphi 0, %s219
      %s234 = sphi 0, %s220
      %s242 = sphi 0, %s244
      %s245 = sphi 0, %s242
      %s246 = sphi 0, %s245
      %s262 = sphi 0, %s246
    $region4: #{tpu_custom_call.1} parent=1 // loop_header_branch
      %33 = sbr.rel (%p31) target = $region8
    $region5: #{tpu_custom_call.1} parent=1 // loop_body
      %s35 = ssub.s32 %s30, 1
      %s36 = ssub.s32 %s30, 2
      %s43 = sadd.s32 1, %s38
      %p44 = scmp.ge.s32.totalorder %s43, 1
      %s45 = scalar_select %p44, 0, %s43
      %s46 = sadd.s32 1, %s37
      %s47 = scalar_select %p44, %s46, %s37
      %p48 = scmp.ge.s32.totalorder %s47, 2
      %s49 = scalar_select %p48, 0, %s47
      %s50 = ssub.s32 %s37, %s49
      %s51 = ssub.s32 %s38, %s45
      %s52 = sor.u32 %s50, %s51
      %p53 = scmp.eq.s32.totalorder %s52, 0
      %s55 = sadd.s32 %s54, 1
      %s56 = scalar_select %p53, %s54, %s55
      %p59 = pneg %p53
      %p60 = scmp.eq.s32.totalorder %s30, 1
      %p61 = por %p59, %p60
      %p62 = scmp.ne.s32.totalorder %s54, %s57
      %p63 = scmp.eq.s32.totalorder %s30, 0
      %p64 = por %p62, %p63
      %p65 = scmp.ne.s32.totalorder %s54, %s57
      %p66 = scmp.eq.s32.totalorder %s35, 1
      %p67 = por %p65, %p66
      %p68 = scmp.ne.s32.totalorder %s57, %s58
      %p69 = scmp.eq.s32.totalorder %s35, 0
      %p70 = por %p68, %p69
      %p71 = scmp.ne.s32.totalorder %s57, %s58
      %p72 = scmp.eq.s32.totalorder %s36, 1
      %p73 = por %p71, %p72
      %p75 = scmp.ne.s32.totalorder %s58, %s74
      %p76 = scmp.eq.s32.totalorder %s36, 0
      %p77 = por %p75, %p76
      %s78 = ssub.s32 %s38, 1
      %p79 = scmp.gt.s32.totalorder %s78, 0
      %s80 = scalar_select %p79, %s78, 0
      %s81 = ssub.s32 %s45, 1
      %p82 = scmp.gt.s32.totalorder %s81, 0
      %s83 = scalar_select %p82, %s81, 0
      %s84 = ssub.s32 %s37, %s49
      %s85 = ssub.s32 %s80, %s83
      %s86 = sor.u32 %s84, %s85
      %p87 = scmp.eq.s32.totalorder %s86, 0
      %s89 = sadd.s32 %s88, 1
      %s90 = scalar_select %p87, %s88, %s89
      %p93 = pneg %p87
      %p94 = scmp.eq.s32.totalorder %s30, 1
      %p95 = por %p93, %p94
      %p96 = scmp.ne.s32.totalorder %s88, %s91
      %p97 = scmp.eq.s32.totalorder %s30, 0
      %p98 = por %p96, %p97
      %p99 = scmp.ne.s32.totalorder %s88, %s91
      %p100 = scmp.eq.s32.totalorder %s35, 1
      %p101 = por %p99, %p100
      %p102 = scmp.ne.s32.totalorder %s91, %s92
      %p103 = scmp.eq.s32.totalorder %s35, 0
      %p104 = por %p102, %p103
      %p105 = scmp.ne.s32.totalorder %s91, %s92
      %p106 = scmp.eq.s32.totalorder %s36, 1
      %p107 = por %p105, %p106
      %p109 = scmp.ne.s32.totalorder %s92, %s108
      %p110 = scmp.eq.s32.totalorder %s36, 0
      %p111 = por %p109, %p110
      %s113 = sadd.s32 %s112, 1
      %p116 = scmp.eq.s32.totalorder %s30, 1
      %p117 = scmp.ne.s32.totalorder %s112, %s114
      %p118 = scmp.eq.s32.totalorder %s30, 0
      %p119 = por %p117, %p118
      %p120 = scmp.ne.s32.totalorder %s112, %s114
      %p121 = scmp.eq.s32.totalorder %s35, 1
      %p122 = por %p120, %p121
      %p123 = scmp.ne.s32.totalorder %s114, %s115
      %p124 = scmp.eq.s32.totalorder %s35, 0
      %p125 = por %p123, %p124
      %p126 = scmp.ne.s32.totalorder %s114, %s115
      %p127 = scmp.eq.s32.totalorder %s36, 1
      %p128 = por %p126, %p127
      %p130 = scmp.ne.s32.totalorder %s115, %s129
      %p131 = scmp.eq.s32.totalorder %s36, 0
      %p132 = por %p130, %p131
      %s134 = sadd.s32 %s133, 1
      %p137 = scmp.eq.s32.totalorder %s30, 1
      %p138 = scmp.ne.s32.totalorder %s133, %s135
      %p139 = scmp.eq.s32.totalorder %s30, 0
      %p140 = por %p138, %p139
      %p141 = scmp.ne.s32.totalorder %s133, %s135
      %p142 = scmp.eq.s32.totalorder %s35, 1
      %p143 = por %p141, %p142
      %p144 = scmp.ne.s32.totalorder %s135, %s136
      %p145 = scmp.eq.s32.totalorder %s35, 0
      %p146 = por %p144, %p145
      %p147 = scmp.ne.s32.totalorder %s135, %s136
      %p148 = scmp.eq.s32.totalorder %s36, 1
      %p149 = por %p147, %p148
      %p151 = scmp.ne.s32.totalorder %s136, %s150
      %p152 = scmp.eq.s32.totalorder %s36, 0
      %p153 = por %p151, %p152
      %s155 = sadd.s32 %s154, 1
      %p158 = scmp.eq.s32.totalorder %s30, 1
      %p159 = scmp.ne.s32.totalorder %s154, %s156
      %p160 = scmp.eq.s32.totalorder %s30, 0
      %p161 = por %p159, %p160
      %p162 = scmp.ne.s32.totalorder %s154, %s156
      %p163 = scmp.eq.s32.totalorder %s35, 1
      %p164 = por %p162, %p163
      %p165 = scmp.ne.s32.totalorder %s156, %s157
      %p166 = scmp.eq.s32.totalorder %s35, 0
      %p167 = por %p165, %p166
      %p168 = scmp.ne.s32.totalorder %s156, %s157
      %p169 = scmp.eq.s32.totalorder %s36, 1
      %p170 = por %p168, %p169
      %p172 = scmp.ne.s32.totalorder %s157, %s171
      %p173 = scmp.eq.s32.totalorder %s36, 0
      %p174 = por %p172, %p173
      %s176 = sadd.s32 %s175, 1
      %p179 = scmp.eq.s32.totalorder %s30, 1
      %p180 = scmp.ne.s32.totalorder %s175, %s177
      %p181 = scmp.eq.s32.totalorder %s30, 0
      %p182 = por %p180, %p181
      %p183 = scmp.ne.s32.totalorder %s175, %s177
      %p184 = scmp.eq.s32.totalorder %s35, 1
      %p185 = por %p183, %p184
      %p186 = scmp.ne.s32.totalorder %s177, %s178
      %p187 = scmp.eq.s32.totalorder %s35, 0
      %p188 = por %p186, %p187
      %p189 = scmp.ne.s32.totalorder %s177, %s178
      %p190 = scmp.eq.s32.totalorder %s36, 1
      %p191 = por %p189, %p190
      %p193 = scmp.ne.s32.totalorder %s178, %s192
      %p194 = scmp.eq.s32.totalorder %s36, 0
      %p195 = por %p193, %p194
      %s197 = sadd.s32 %s196, 1
      %p200 = scmp.eq.s32.totalorder %s30, 1
      %p201 = scmp.ne.s32.totalorder %s196, %s198
      %p202 = scmp.eq.s32.totalorder %s30, 0
      %p203 = por %p201, %p202
      %p204 = scmp.ne.s32.totalorder %s196, %s198
      %p205 = scmp.eq.s32.totalorder %s35, 1
      %p206 = por %p204, %p205
      %p207 = scmp.ne.s32.totalorder %s198, %s199
      %p208 = scmp.eq.s32.totalorder %s35, 0
      %p209 = por %p207, %p208
      %p210 = scmp.ne.s32.totalorder %s198, %s199
      %p211 = scmp.eq.s32.totalorder %s36, 1
      %p212 = por %p210, %p211
      %p214 = scmp.ne.s32.totalorder %s199, %s213
      %p215 = scmp.eq.s32.totalorder %s36, 0
      %p216 = por %p214, %p215
      %s218 = sadd.s32 %s217, 1
      %p221 = scmp.eq.s32.totalorder %s30, 1
      %p222 = scmp.ne.s32.totalorder %s217, %s219
      %p223 = scmp.eq.s32.totalorder %s30, 0
      %p224 = por %p222, %p223
      %p225 = scmp.ne.s32.totalorder %s217, %s219
      %p226 = scmp.eq.s32.totalorder %s35, 1
      %p227 = por %p225, %p226
      %p228 = scmp.ne.s32.totalorder %s219, %s220
      %p229 = scmp.eq.s32.totalorder %s35, 0
      %p230 = por %p228, %p229
      %p231 = scmp.ne.s32.totalorder %s219, %s220
      %p232 = scmp.eq.s32.totalorder %s36, 1
      %p233 = por %p231, %p232
      %p235 = scmp.ne.s32.totalorder %s220, %s234
      %p236 = scmp.eq.s32.totalorder %s36, 0
      %p237 = por %p235, %p236
      %s238 = ssub.s32 %s37, %s49
      %s239 = ssub.s32 %s38, %s45
      %s240 = sor.u32 %s238, %s239
      %p241 = scmp.eq.s32.totalorder %s240, 0
      %s243 = sadd.s32 %s242, 1
      %s244 = scalar_select %p241, %s242, %s243
      %p247 = pneg %p241
      %p248 = scmp.eq.s32.totalorder %s30, 1
      %p249 = por %p247, %p248
      %p250 = scmp.ne.s32.totalorder %s242, %s245
      %p251 = scmp.eq.s32.totalorder %s30, 0
      %p252 = por %p250, %p251
      %p253 = scmp.ne.s32.totalorder %s242, %s245
      %p254 = scmp.eq.s32.totalorder %s35, 1
      %p255 = por %p253, %p254
      %p256 = scmp.ne.s32.totalorder %s245, %s246
      %p257 = scmp.eq.s32.totalorder %s35, 0
      %p258 = por %p256, %p257
      %p259 = scmp.ne.s32.totalorder %s245, %s246
      %p260 = scmp.eq.s32.totalorder %s36, 1
      %p261 = por %p259, %p260
      %p263 = scmp.ne.s32.totalorder %s246, %s262
      %p264 = scmp.eq.s32.totalorder %s36, 0
      %p265 = por %p263, %p264
      %p266 = scmp.le.s32.totalorder 1, %s30
      %p267 = scmp.lt.s32.totalorder %s30, 3
      %p268 = pnand %p266, %p267
      %p269 = pneg %p268
      // Predicated region
      $region9: #{tpu_custom_call.1} parent=5 // pred_check
        _
      $region10: #{tpu_custom_call.1} parent=5 // pred_check_branch
        %271 = sbr.rel (%p268) target = $region12
      $region11: #{tpu_custom_call.1} parent=5 // pred_region
        %s272 = ssub.s32 %s30, 1
        // Predicated region
        $region13: #{tpu_custom_call.1} parent=11 // pred_check
          %p273 = pneg %p125
        $region14: #{tpu_custom_call.1} parent=11 // pred_check_branch
          %275 = sbr.rel (%p273) target = $region16
        $region15: #{tpu_custom_call.1} parent=11 // pred_region
          %s277 = ssub.s32 256, 256
          %278 = vsyncadd [#allocation8], %s277
          %s279 = sshll.u32 [#allocation9], 4
          %s280 = int_to_ptr.vmem [resolvable:$true] %s279
          %285 = dma.hbm_to_vmem [thread:$0]  %s3, 256, %s280, [#allocation8], 64, 64, 4
        $region16: #{tpu_custom_call.1} parent=11 // pred_fallthru
          _
        // Predicated region
        $region17: #{tpu_custom_call.1} parent=11 // pred_check
          %p286 = pneg %p146
        $region18: #{tpu_custom_call.1} parent=11 // pred_check_branch
          %288 = sbr.rel (%p286) target = $region20
        $region19: #{tpu_custom_call.1} parent=11 // pred_region
          %s290 = ssub.s32 256, 256
          %291 = vsyncadd [#allocation11], %s290
          %s292 = sshll.u32 [#allocation10], 4
          %s293 = int_to_ptr.vmem [resolvable:$true] %s292
          %298 = dma.hbm_to_vmem [thread:$0]  %s4, 256, %s293, [#allocation11], 64, 64, 4
        $region20: #{tpu_custom_call.1} parent=11 // pred_fallthru
          _
        // Predicated region
        $region21: #{tpu_custom_call.1} parent=11 // pred_check
          %p299 = pneg %p167
        $region22: #{tpu_custom_call.1} parent=11 // pred_check_branch
          %301 = sbr.rel (%p299) target = $region24
        $region23: #{tpu_custom_call.1} parent=11 // pred_region
          _
        $region24: #{tpu_custom_call.1} parent=11 // pred_fallthru
          _
        // Predicated region
        $region25: #{tpu_custom_call.1} parent=11 // pred_check
          %p302 = pneg %p188
        $region26: #{tpu_custom_call.1} parent=11 // pred_check_branch
          %304 = sbr.rel (%p302) target = $region28
        $region27: #{tpu_custom_call.1} parent=11 // pred_region
          %s306 = ssub.s32 1024, 1024
          %307 = vsyncadd [#allocation11], %s306
          %s308 = sshll.u32 [#allocation12], 4
          %s309 = int_to_ptr.vmem [resolvable:$true] %s308
          %314 = dma.hbm_to_vmem [thread:$0]  %s6, 1024, %s309, [#allocation11], 64, 64, 4
        $region28: #{tpu_custom_call.1} parent=11 // pred_fallthru
          _
        // Predicated region
        $region29: #{tpu_custom_call.1} parent=11 // pred_check
          %p315 = pneg %p209
        $region30: #{tpu_custom_call.1} parent=11 // pred_check_branch
          %317 = sbr.rel (%p315) target = $region32
        $region31: #{tpu_custom_call.1} parent=11 // pred_region
          %s319 = ssub.s32 256, 256
          %320 = vsyncadd [#allocation14], %s319
          %s321 = sshll.u32 [#allocation13], 4
          %s322 = int_to_ptr.vmem [resolvable:$true] %s321
          %327 = dma.hbm_to_vmem [thread:$0]  %s7, 256, %s322, [#allocation14], 64, 64, 4
        $region32: #{tpu_custom_call.1} parent=11 // pred_fallthru
          _
        // Predicated region
        $region33: #{tpu_custom_call.1} parent=11 // pred_check
          %p328 = pneg %p230
        $region34: #{tpu_custom_call.1} parent=11 // pred_check_branch
          %330 = sbr.rel (%p328) target = $region36
        $region35: #{tpu_custom_call.1} parent=11 // pred_region
          _
        $region36: #{tpu_custom_call.1} parent=11 // pred_fallthru
          _
      $region12: #{tpu_custom_call.1} parent=5 // pred_fallthru
        _
      %p331 = scmp.lt.s32.totalorder %s30, 2
      // Predicated region
      $region37: #{tpu_custom_call.1} parent=5 // pred_check
        %p332 = pneg %p331
      $region38: #{tpu_custom_call.1} parent=5 // pred_check_branch
        %334 = sbr.rel (%p332) target = $region40
      $region39: #{tpu_custom_call.1} parent=5 // pred_region
        // Predicated region
        $region41: #{tpu_custom_call.1} parent=39 // pred_check
          %p335 = pneg %p64
        $region42: #{tpu_custom_call.1} parent=39 // pred_check_branch
          %337 = sbr.rel (%p335) target = $region44
        $region43: #{tpu_custom_call.1} parent=39 // pred_region
          %s338 = sand.u32 %s54, 1
          %s339 = scalar_lea.sflag [#allocation5], %s338
          %s340 = sand.u32 %s54, 1
          %s341 = smul.addr %s340, 4
          %s342 = scalar_lea.vmem [#allocation4], %s341
          %s344 = ssub.s32 64, 64
          %345 = vsyncadd %s339, %s344
          %s346 = sadd.s32 %s38, %s37
          %s347 = smul.addr %s346, 64
          %s348 = scalar_lea.hbm %s1, %s347
          %s350 = sshll.u32 %s342, 4
          %s351 = int_to_ptr.vmem [resolvable:$true] %s350
          %353 = dma.hbm_to_vmem [thread:$0]  %s348, 64, %s351, %s339
        $region44: #{tpu_custom_call.1} parent=39 // pred_fallthru
          _
        // Predicated region
        $region45: #{tpu_custom_call.1} parent=39 // pred_check
          %p354 = pneg %p98
        $region46: #{tpu_custom_call.1} parent=39 // pred_check_branch
          %356 = sbr.rel (%p354) target = $region48
        $region47: #{tpu_custom_call.1} parent=39 // pred_region
          %s357 = sand.u32 %s30, 1
          %s358 = scalar_lea.sflag [#allocation8], %s357
          %s359 = sand.u32 %s88, 1
          %s360 = smul.addr %s359, 4
          %s361 = scalar_lea.vmem [#allocation7], %s360
          %s362 = ssub.s32 %s38, 1
          %p363 = scmp.gt.s32.totalorder %s362, 0
          %s364 = scalar_select %p363, %s362, 0
          %s366 = ssub.s32 64, 64
          %367 = vsyncadd %s358, %s366
          %s368 = sadd.s32 %s364, %s37
          %s369 = smul.addr %s368, 64
          %s370 = scalar_lea.hbm %s2, %s369
          %s372 = sshll.u32 %s361, 4
          %s373 = int_to_ptr.vmem [resolvable:$true] %s372
          %375 = dma.hbm_to_vmem [thread:$0]  %s370, 64, %s373, %s358
        $region48: #{tpu_custom_call.1} parent=39 // pred_fallthru
          _
      $region40: #{tpu_custom_call.1} parent=5 // pred_fallthru
        _
      %p376 = scmp.le.s32.totalorder 1, %s30
      %p377 = scmp.lt.s32.totalorder %s30, 3
      %p378 = pnand %p376, %p377
      %p379 = pneg %p378
      // Predicated region
      $region49: #{tpu_custom_call.1} parent=5 // pred_check
        _
      $region50: #{tpu_custom_call.1} parent=5 // pred_check_branch
        %381 = sbr.rel (%p378) target = $region52
      $region51: #{tpu_custom_call.1} parent=5 // pred_region
        %s382 = ssub.s32 %s30, 1
        %s383 = sand.u32 %s57, 1
        %s384 = scalar_lea.sflag [#allocation5], %s383
        %s385 = sand.u32 %s57, 1
        %s386 = smul.addr %s385, 4
        %s387 = scalar_lea.vmem [#allocation4], %s386
        // Predicated region
        $region53: #{tpu_custom_call.1} parent=51 // pred_check
          %p388 = pneg %p70
        $region54: #{tpu_custom_call.1} parent=51 // pred_check_branch
          %390 = sbr.rel (%p388) target = $region56
        $region55: #{tpu_custom_call.1} parent=51 // pred_region
          %391 = dma.done %s384, 64
        $region56: #{tpu_custom_call.1} parent=51 // pred_fallthru
          _
        %s392 = sand.u32 %s35, 1
        %s393 = scalar_lea.sflag [#allocation8], %s392
        %s394 = sand.u32 %s91, 1
        %s395 = smul.addr %s394, 4
        %s396 = scalar_lea.vmem [#allocation7], %s395
        // Predicated region
        $region57: #{tpu_custom_call.1} parent=51 // pred_check
          %p397 = pneg %p104
        $region58: #{tpu_custom_call.1} parent=51 // pred_check_branch
          %399 = sbr.rel (%p397) target = $region60
        $region59: #{tpu_custom_call.1} parent=51 // pred_region
          %400 = dma.done %s393, 64
        $region60: #{tpu_custom_call.1} parent=51 // pred_fallthru
          _
        // Predicated region
        $region61: #{tpu_custom_call.1} parent=51 // pred_check
          %p401 = pneg %p125
        $region62: #{tpu_custom_call.1} parent=51 // pred_check_branch
          %403 = sbr.rel (%p401) target = $region64
        $region63: #{tpu_custom_call.1} parent=51 // pred_region
          %404 = dma.done [#allocation8], 256
        $region64: #{tpu_custom_call.1} parent=51 // pred_fallthru
          _
        // Predicated region
        $region65: #{tpu_custom_call.1} parent=51 // pred_check
          %p405 = pneg %p146
        $region66: #{tpu_custom_call.1} parent=51 // pred_check_branch
          %407 = sbr.rel (%p405) target = $region68
        $region67: #{tpu_custom_call.1} parent=51 // pred_region
          %408 = dma.done [#allocation11], 256
        $region68: #{tpu_custom_call.1} parent=51 // pred_fallthru
          _
        // Predicated region
        $region69: #{tpu_custom_call.1} parent=51 // pred_check
          %p409 = pneg %p188
        $region70: #{tpu_custom_call.1} parent=51 // pred_check_branch
          %411 = sbr.rel (%p409) target = $region72
        $region71: #{tpu_custom_call.1} parent=51 // pred_region
          %412 = dma.done [#allocation11], 1024
        $region72: #{tpu_custom_call.1} parent=51 // pred_fallthru
          _
        // Predicated region
        $region73: #{tpu_custom_call.1} parent=51 // pred_check
          %p413 = pneg %p209
        $region74: #{tpu_custom_call.1} parent=51 // pred_check_branch
          %415 = sbr.rel (%p413) target = $region76
        $region75: #{tpu_custom_call.1} parent=51 // pred_region
          %416 = dma.done [#allocation14], 256
        $region76: #{tpu_custom_call.1} parent=51 // pred_fallthru
          _
        %s417 = sand.u32 %s57, 1
        %s418 = scalar_lea.sflag [#allocation5], %s417
        %s419 = sand.u32 %s57, 1
        %s420 = smul.addr %s419, 4
        %s421 = scalar_lea.vmem [#allocation4], %s420
        %p422 = pneg %p70
        %p423 = pneg %p67
        %s424 = sand.u32 %s35, 1
        %s425 = scalar_lea.sflag [#allocation8], %s424
        %s426 = sand.u32 %s91, 1
        %s427 = smul.addr %s426, 4
        %s428 = scalar_lea.vmem [#allocation7], %s427
        %p429 = pneg %p104
        %p430 = pneg %p101
        %p431 = pneg %p125
        %p432 = pneg %p122
        %p433 = pneg %p146
        %p434 = pneg %p143
        %p435 = pneg %p167
        %p436 = pneg %p164
        %p437 = pneg %p188
        %p438 = pneg %p185
        %p439 = pneg %p209
        %p440 = pneg %p206
        %p441 = pneg %p230
        %p442 = pneg %p227
        %p443 = pneg %p258
        %p444 = pneg %p255
        %s445 = sand.u32 %s245, 1
        %s446 = scalar_lea.sflag [#allocation6], %s445
        %s447 = sand.u32 %s245, 1
        %s448 = smul.addr %s447, 4
        %s449 = scalar_lea.vmem [#allocation15], %s448
        %s450 = ssub.s32 %s40, 1
        %p451 = scmp.gt.s32.totalorder %s450, 0
        %s452 = scalar_select %p451, %s450, 0
        %v454 = vld [vmem:[%s387] sm:$0xf]
        %v455 = vld [vmem:[#allocation9] sm:$0xf]
        %v456 = vld [vmem:[#allocation9 + $0x4] sm:$0xf]
        %v457 = vld [vmem:[#allocation9 + $0x8] sm:$0xf]
        %v458 = vld [vmem:[#allocation9 + $0xc] sm:$0xf]
        %v463 = vunpack.c.l.b16 %v455
        %v464 = vunpack.c.l.b16 %v456
        %v465 = vunpack.c.l.b16 %v457
        %v466 = vunpack.c.l.b16 %v458
        %v467 = vpack.c.b16 %v464, %v463
        %v468 = vpack.c.b16 %v466, %v465
        %vm471 = vcmask 261120
        %v473 = vsel %vm471, %v454, 0
        %475 = vmatprep.subr.bf16.mxu0 0
        %476 = vmatpush1.bf16.msra.mxu0 0
        %477 = vmatprep.subr.bf16.mxu0 0
        %478 = vmatpush1.bf16.msra.mxu0 0
        %479 = vmatprep.subr.bf16.mxu0 0
        %480 = vmatpush1.bf16.msra.mxu0 0
        %481 = vmatprep.subr.bf16.mxu0 0
        %482 = vmatpush1.bf16.msra.mxu0 0
        %483 = vmatprep.subr.bf16.mxu0 0
        %484 = vmatpush1.bf16.msra.mxu0 0
        %485 = vmatprep.subr.bf16.mxu0 0
        %486 = vmatpush1.bf16.msra.mxu0 0
        %487 = vmatprep.subr.bf16.mxu0 0
        %488 = vmatpush1.bf16.msra.mxu0 %v468
        %489 = vmatprep.subr.bf16.mxu0 0
        %490 = vmatpush1.bf16.msra.mxu0 %v467
        %491 = vmatprep.subr.bf16.mxu0 0
        %492 = vmatpush2.bf16.msra.mxu0 0
        %493 = vmatprep.subr.bf16.mxu0 0
        %494 = vmatpush2.bf16.msra.mxu0 0
        %495 = vmatprep.subr.bf16.mxu0 0
        %496 = vmatpush2.bf16.msra.mxu0 0
        %497 = vmatprep.subr.bf16.mxu0 0
        %498 = vmatpush2.bf16.msra.mxu0 0
        %499 = vmatprep.subr.bf16.mxu0 0
        %500 = vmatpush2.bf16.msra.mxu0 0
        %501 = vmatprep.subr.bf16.mxu0 0
        %502 = vmatpush2.bf16.msra.mxu0 0
        %503 = vmatprep.subr.bf16.mxu0 0
        %504 = vmatpush2.bf16.msra.mxu0 0
        %505 = vmatprep.subr.bf16.mxu0 0
        %506 = vmatpush2.bf16.msra.mxu0 0
        %507 = vmatprep.mubr.bf16.mxu0 0
        %508 = vmatmul.mubr.bf16.gmra.mxu0 %v473
        %v509 = vpop.f32.mrf.mxu0
        %v510 = vadd.f32 0.0, %v509
        %v511 = vpop.f32.mrf.mxu0
        %v512 = vpop.f32.mrf.mxu0
        %v513 = vpop.f32.mrf.mxu0
        %514 = vdwg.mxu0
        %v515 = vld [vmem:[#allocation10] sm:$0xf]
        %v516 = vld [vmem:[#allocation10 + $0x4] sm:$0xf]
        %v517 = vld [vmem:[#allocation10 + $0x8] sm:$0xf]
        %v518 = vld [vmem:[#allocation10 + $0xc] sm:$0xf]
        %v523 = vunpack.c.l.b16 %v515
        %v524 = vunpack.c.l.b16 %v516
        %v525 = vunpack.c.l.b16 %v517
        %v526 = vunpack.c.l.b16 %v518
        %v527 = vpack.c.b16 %v524, %v523
        %v528 = vpack.c.b16 %v526, %v525
        %531 = vmatprep.subr.bf16.mxu0 0
        %532 = vmatpush1.bf16.msra.mxu0 0
        %533 = vmatprep.subr.bf16.mxu0 0
        %534 = vmatpush1.bf16.msra.mxu0 0
        %535 = vmatprep.subr.bf16.mxu0 0
        %536 = vmatpush1.bf16.msra.mxu0 0
        %537 = vmatprep.subr.bf16.mxu0 0
        %538 = vmatpush1.bf16.msra.mxu0 0
        %539 = vmatprep.subr.bf16.mxu0 0
        %540 = vmatpush1.bf16.msra.mxu0 0
        %541 = vmatprep.subr.bf16.mxu0 0
        %542 = vmatpush1.bf16.msra.mxu0 0
        %543 = vmatprep.subr.bf16.mxu0 0
        %544 = vmatpush1.bf16.msra.mxu0 %v528
        %545 = vmatprep.subr.bf16.mxu0 0
        %546 = vmatpush1.bf16.msra.mxu0 %v527
        %547 = vmatprep.subr.bf16.mxu0 0
        %548 = vmatpush2.bf16.msra.mxu0 0
        %549 = vmatprep.subr.bf16.mxu0 0
        %550 = vmatpush2.bf16.msra.mxu0 0
        %551 = vmatprep.subr.bf16.mxu0 0
        %552 = vmatpush2.bf16.msra.mxu0 0
        %553 = vmatprep.subr.bf16.mxu0 0
        %554 = vmatpush2.bf16.msra.mxu0 0
        %555 = vmatprep.subr.bf16.mxu0 0
        %556 = vmatpush2.bf16.msra.mxu0 0
        %557 = vmatprep.subr.bf16.mxu0 0
        %558 = vmatpush2.bf16.msra.mxu0 0
        %559 = vmatprep.subr.bf16.mxu0 0
        %560 = vmatpush2.bf16.msra.mxu0 0
        %561 = vmatprep.subr.bf16.mxu0 0
        %562 = vmatpush2.bf16.msra.mxu0 0
        %563 = vmatprep.mubr.bf16.mxu0 0
        %564 = vmatmul.mubr.bf16.gmra.mxu0 %v473
        %v565 = vpop.f32.mrf.mxu0
        %v566 = vadd.f32 0.0, %v565
        %v567 = vpop.f32.mrf.mxu0
        %v568 = vpop.f32.mrf.mxu0
        %v569 = vpop.f32.mrf.mxu0
        %570 = vdwg.mxu0
        %v571 = vld [vmem:[%s396] sm:$0xf]
        %v573 = vunpack.c.l.b16 %v571
        %v574 = vpack.c.b16 %v573, %v573
        %v576 = vshrl.u32 %v574, 16
        %v578 = vrot.slane %v576, 3
        %v580 = vsel %vm471, %v578, 0
        %582 = vmatprep.subr.bf16.mxu0 0
        %583 = vmatpush1.bf16.msra.mxu0 0
        %584 = vmatprep.subr.bf16.mxu0 0
        %585 = vmatpush1.bf16.msra.mxu0 0
        %586 = vmatprep.subr.bf16.mxu0 0
        %587 = vmatpush1.bf16.msra.mxu0 0
        %588 = vmatprep.subr.bf16.mxu0 0
        %589 = vmatpush1.bf16.msra.mxu0 0
        %590 = vmatprep.subr.bf16.mxu0 0
        %591 = vmatpush1.bf16.msra.mxu0 0
        %592 = vmatprep.subr.bf16.mxu0 0
        %593 = vmatpush1.bf16.msra.mxu0 0
        %594 = vmatprep.subr.bf16.mxu0 0
        %595 = vmatpush1.bf16.msra.mxu0 %v468
        %596 = vmatprep.subr.bf16.mxu0 0
        %597 = vmatpush1.bf16.msra.mxu0 %v467
        %598 = vmatprep.subr.bf16.mxu0 0
        %599 = vmatpush2.bf16.msra.mxu0 0
        %600 = vmatprep.subr.bf16.mxu0 0
        %601 = vmatpush2.bf16.msra.mxu0 0
        %602 = vmatprep.subr.bf16.mxu0 0
        %603 = vmatpush2.bf16.msra.mxu0 0
        %604 = vmatprep.subr.bf16.mxu0 0
        %605 = vmatpush2.bf16.msra.mxu0 0
        %606 = vmatprep.subr.bf16.mxu0 0
        %607 = vmatpush2.bf16.msra.mxu0 0
        %608 = vmatprep.subr.bf16.mxu0 0
        %609 = vmatpush2.bf16.msra.mxu0 0
        %610 = vmatprep.subr.bf16.mxu0 0
        %611 = vmatpush2.bf16.msra.mxu0 0
        %612 = vmatprep.subr.bf16.mxu0 0
        %613 = vmatpush2.bf16.msra.mxu0 0
        %614 = vmatprep.mubr.bf16.mxu0 0
        %615 = vmatmul.mubr.bf16.gmra.mxu0 %v580
        %v616 = vpop.f32.mrf.mxu0
        %v617 = vadd.f32 0.0, %v616
        %v618 = vpop.f32.mrf.mxu0
        %v619 = vpop.f32.mrf.mxu0
        %v620 = vpop.f32.mrf.mxu0
        %621 = vdwg.mxu0
        %p622 = scmp.eq.s32.totalorder %s40, 0
        %s623 = scalar_select %p622, 1, 0
        %v624 = vstv %s623
        %vm625 = vcmp.eq.s32.totalorder %v624, 1
        %v626 = vsel %vm625, 0.0, %v617
        %v627 = vlaneseq
        %v628 = vshrl.u32 %v627, 7
        %vm629 = vcmp.eq.s32.totalorder %v628, 0
        %v630 = vrot.slane %v510, 7
        %v631 = vsel %vm629, 1, 0
        %vm632 = vcmp.eq.s32.totalorder %v631, 1
        %v633 = vlaneseq
        %v634 = vshrl.u32 %v633, 7
        %v635 = vsub.s32 0, %v634
        %v636 = vrot.slane %v626, %v635
        %v637 = vsel %vm632, %v636, %v630
        %v638 = vadd.f32 %v637, %v566
        %v639 = vld [vmem:[%s5] sm:$0x1]
        %v641 = vlaneseq
        %v642 = vshrl.u32 %v641, 7
        %v643 = vsub.s32 0, %v642
        %v644 = vrot.slane %v639, %v643
        %v646 = vadd.f32 %v638, %v644
        %vm647 = vcmp.ge.f32.partialorder %v646, 0.0
        %v648 = vmul.f32 %v646, 0.01
        %v649 = vsel %vm647, %v646, %v648
        %v650 = vpack.c.bf16 %v649, %v649
        %v651 = vld [vmem:[#allocation12] sm:$0xf]
        %v652 = vld [vmem:[#allocation12 + $0x4] sm:$0xf]
        %v653 = vld [vmem:[#allocation12 + $0x8] sm:$0xf]
        %v654 = vld [vmem:[#allocation12 + $0xc] sm:$0xf]
        %v655 = vld [vmem:[#allocation12 + $0x10] sm:$0xf]
        %v656 = vld [vmem:[#allocation12 + $0x14] sm:$0xf]
        %v657 = vld [vmem:[#allocation12 + $0x18] sm:$0xf]
        %v658 = vld [vmem:[#allocation12 + $0x1c] sm:$0xf]
        %v659 = vld [vmem:[#allocation12 + $0x20] sm:$0xf]
        %v660 = vld [vmem:[#allocation12 + $0x24] sm:$0xf]
        %v661 = vld [vmem:[#allocation12 + $0x28] sm:$0xf]
        %v662 = vld [vmem:[#allocation12 + $0x2c] sm:$0xf]
        %v663 = vld [vmem:[#allocation12 + $0x30] sm:$0xf]
        %v664 = vld [vmem:[#allocation12 + $0x34] sm:$0xf]
        %v665 = vld [vmem:[#allocation12 + $0x38] sm:$0xf]
        %v666 = vld [vmem:[#allocation12 + $0x3c] sm:$0xf]
        %v667 = vld [vmem:[#allocation13] sm:$0xf]
        %v668 = vld [vmem:[#allocation13 + $0x4] sm:$0xf]
        %v669 = vld [vmem:[#allocation13 + $0x8] sm:$0xf]
        %v670 = vld [vmem:[#allocation13 + $0xc] sm:$0xf]
        %v675 = vunpack.c.l.b16 %v667
        %v676 = vunpack.c.l.b16 %v668
        %v677 = vunpack.c.l.b16 %v669
        %v678 = vunpack.c.l.b16 %v670
        %v679 = vpack.c.b16 %v676, %v675
        %v680 = vpack.c.b16 %v678, %v677
        %683 = vmatprep.subr.bf16.mxu0 0
        %684 = vmatpush1.bf16.msra.mxu0 0
        %685 = vmatprep.subr.bf16.mxu0 0
        %686 = vmatpush1.bf16.msra.mxu0 0
        %687 = vmatprep.subr.bf16.mxu0 0
        %688 = vmatpush1.bf16.msra.mxu0 0
        %689 = vmatprep.subr.bf16.mxu0 0
        %690 = vmatpush1.bf16.msra.mxu0 0
        %691 = vmatprep.subr.bf16.mxu0 0
        %692 = vmatpush1.bf16.msra.mxu0 0
        %693 = vmatprep.subr.bf16.mxu0 0
        %694 = vmatpush1.bf16.msra.mxu0 0
        %695 = vmatprep.subr.bf16.mxu0 0
        %696 = vmatpush1.bf16.msra.mxu0 %v680
        %697 = vmatprep.subr.bf16.mxu0 0
        %698 = vmatpush1.bf16.msra.mxu0 %v679
        %699 = vmatprep.subr.bf16.mxu0 0
        %700 = vmatpush2.bf16.msra.mxu0 0
        %701 = vmatprep.subr.bf16.mxu0 0
        %702 = vmatpush2.bf16.msra.mxu0 0
        %703 = vmatprep.subr.bf16.mxu0 0
        %704 = vmatpush2.bf16.msra.mxu0 0
        %705 = vmatprep.subr.bf16.mxu0 0
        %706 = vmatpush2.bf16.msra.mxu0 0
        %707 = vmatprep.subr.bf16.mxu0 0
        %708 = vmatpush2.bf16.msra.mxu0 0
        %709 = vmatprep.subr.bf16.mxu0 0
        %710 = vmatpush2.bf16.msra.mxu0 0
        %711 = vmatprep.subr.bf16.mxu0 0
        %712 = vmatpush2.bf16.msra.mxu0 0
        %713 = vmatprep.subr.bf16.mxu0 0
        %714 = vmatpush2.bf16.msra.mxu0 0
        %715 = vmatprep.mubr.bf16.mxu0 0
        %716 = vmatmul.mubr.bf16.gmra.mxu0 %v473
        %v717 = vpop.f32.mrf.mxu0
        %v718 = vadd.f32 0.0, %v717
        %v719 = vpop.f32.mrf.mxu0
        %v720 = vpop.f32.mrf.mxu0
        %v721 = vpop.f32.mrf.mxu0
        %722 = vdwg.mxu0
        %v739 = vunpack.c.l.b16 %v651
        %v740 = vunpack.c.l.b16 %v652
        %v741 = vunpack.c.l.b16 %v653
        %v742 = vunpack.c.l.b16 %v654
        %v743 = vunpack.c.l.b16 %v655
        %v744 = vunpack.c.l.b16 %v656
        %v745 = vunpack.c.l.b16 %v657
        %v746 = vunpack.c.l.b16 %v658
        %v747 = vunpack.c.l.b16 %v659
        %v748 = vunpack.c.l.b16 %v660
        %v749 = vunpack.c.l.b16 %v661
        %v750 = vunpack.c.l.b16 %v662
        %v751 = vunpack.c.l.b16 %v663
        %v752 = vunpack.c.l.b16 %v664
        %v753 = vunpack.c.l.b16 %v665
        %v754 = vunpack.c.l.b16 %v666
        %v755 = vpack.c.b16 %v740, %v739
        %v756 = vpack.c.b16 %v742, %v741
        %v757 = vpack.c.b16 %v744, %v743
        %v758 = vpack.c.b16 %v746, %v745
        %v759 = vpack.c.b16 %v748, %v747
        %v760 = vpack.c.b16 %v750, %v749
        %v761 = vpack.c.b16 %v752, %v751
        %v762 = vpack.c.b16 %v754, %v753
        %771 = vmatprep.subr.bf16.mxu0 0
        %772 = vmatpush1.bf16.msra.mxu0 %v762
        %773 = vmatprep.subr.bf16.mxu0 0
        %774 = vmatpush1.bf16.msra.mxu0 %v761
        %775 = vmatprep.subr.bf16.mxu0 0
        %776 = vmatpush1.bf16.msra.mxu0 %v760
        %777 = vmatprep.subr.bf16.mxu0 0
        %778 = vmatpush1.bf16.msra.mxu0 %v759
        %779 = vmatprep.subr.bf16.mxu0 0
        %780 = vmatpush1.bf16.msra.mxu0 %v758
        %781 = vmatprep.subr.bf16.mxu0 0
        %782 = vmatpush1.bf16.msra.mxu0 %v757
        %783 = vmatprep.subr.bf16.mxu0 0
        %784 = vmatpush1.bf16.msra.mxu0 %v756
        %785 = vmatprep.subr.bf16.mxu0 0
        %786 = vmatpush1.bf16.msra.mxu0 %v755
        %787 = vmatprep.subr.bf16.mxu0 0
        %788 = vmatpush2.bf16.msra.mxu0 0
        %789 = vmatprep.subr.bf16.mxu0 0
        %790 = vmatpush2.bf16.msra.mxu0 0
        %791 = vmatprep.subr.bf16.mxu0 0
        %792 = vmatpush2.bf16.msra.mxu0 0
        %793 = vmatprep.subr.bf16.mxu0 0
        %794 = vmatpush2.bf16.msra.mxu0 0
        %795 = vmatprep.subr.bf16.mxu0 0
        %796 = vmatpush2.bf16.msra.mxu0 0
        %797 = vmatprep.subr.bf16.mxu0 0
        %798 = vmatpush2.bf16.msra.mxu0 0
        %799 = vmatprep.subr.bf16.mxu0 0
        %800 = vmatpush2.bf16.msra.mxu0 0
        %801 = vmatprep.subr.bf16.mxu0 0
        %802 = vmatpush2.bf16.msra.mxu0 0
        %803 = vmatprep.mubr.bf16.mxu0 0
        %804 = vmatmul.mubr.bf16.gmra.mxu0 %v650
        %v805 = vpop.f32.mrf.mxu0
        %v806 = vadd.f32 %v718, %v805
        %v807 = vpop.f32.mrf.mxu0
        %v808 = vpop.f32.mrf.mxu0
        %v809 = vpop.f32.mrf.mxu0
        %810 = vdwg.mxu0
        %v811 = vld [vmem:[%s8] sm:$0x1]
        %v813 = vlaneseq
        %v814 = vshrl.u32 %v813, 7
        %v815 = vsub.s32 0, %v814
        %v816 = vrot.slane %v811, %v815
        %v818 = vadd.f32 %v806, %v816
        %vm819 = vcmp.ge.f32.partialorder %v818, 0.0
        %v820 = vmul.f32 %v818, 0.01
        %v821 = vsel %vm819, %v818, %v820
        %s822 = sld [smem:[#allocation3 + %s39]]
        %s823 = smul.u32 %s40, 8
        %v824 = vstv %s823
        %v825 = vadd.s32 %v824, %v628
        %v826 = vstv %s822
        %vm827 = vcmp.lt.s32.totalorder %v825, %v826
        %v828 = vsel %vm827, 1, 0
        %vm829 = vcmp.eq.s32.totalorder %v828, 1
        %v830 = vsel %vm829, %v821, 0.0
        %v831 = vpack.c.bf16 %v830, %v830
        %832 = vst [vmem:[%s449] sm:$0xf] %v831
        %s833 = sand.u32 %s245, 1
        %s834 = scalar_lea.sflag [#allocation6], %s833
        %s835 = sand.u32 %s245, 1
        %s836 = smul.addr %s835, 4
        %s837 = scalar_lea.vmem [#allocation15], %s836
        // Predicated region
        $region77: #{tpu_custom_call.1} parent=51 // pred_check
          %p838 = pneg %p255
        $region78: #{tpu_custom_call.1} parent=51 // pred_check_branch
          %840 = sbr.rel (%p838) target = $region80
        $region79: #{tpu_custom_call.1} parent=51 // pred_region
          %s842 = ssub.s32 64, 64
          %843 = vsyncadd %s834, %s842
          %s844 = sadd.s32 %s40, %s39
          %s845 = smul.addr %s844, 64
          %s846 = scalar_lea.hbm %s9, %s845
          %s848 = sshll.u32 %s837, 4
          %s849 = int_to_ptr.vmem [resolvable:$true] %s848
          %851 = dma.vmem_to_hbm [thread:$0]  %s849, 64, %s846, %s834
        $region80: #{tpu_custom_call.1} parent=51 // pred_fallthru
          _
      $region52: #{tpu_custom_call.1} parent=5 // pred_fallthru
        _
      %p852 = scmp.le.s32.totalorder 2, %s30
      // Predicated region
      $region81: #{tpu_custom_call.1} parent=5 // pred_check
        %p853 = pneg %p852
      $region82: #{tpu_custom_call.1} parent=5 // pred_check_branch
        %855 = sbr.rel (%p853) target = $region84
      $region83: #{tpu_custom_call.1} parent=5 // pred_region
        %s856 = ssub.s32 %s30, 2
        // Predicated region
        $region85: #{tpu_custom_call.1} parent=83 // pred_check
          %p857 = pneg %p261
        $region86: #{tpu_custom_call.1} parent=83 // pred_check_branch
          %859 = sbr.rel (%p857) target = $region88
        $region87: #{tpu_custom_call.1} parent=83 // pred_region
          %s860 = sand.u32 %s246, 1
          %s861 = scalar_lea.sflag [#allocation6], %s860
          %s862 = sand.u32 %s246, 1
          %s863 = smul.addr %s862, 4
          %s864 = scalar_lea.vmem [#allocation15], %s863
          %865 = dma.done %s861, 64
        $region88: #{tpu_custom_call.1} parent=83 // pred_fallthru
          _
      $region84: #{tpu_custom_call.1} parent=5 // pred_fallthru
        _
    $region6: #{tpu_custom_call.1} parent=1 // loop_footer
      %s34 = sadd.s32 1, %s30
    $region7: #{tpu_custom_call.1} parent=1 // loop_footer_branch
      %29 = sbr.rel target = $region3
    $region8: #{tpu_custom_call.1} parent=1 // loop_exit
      _
    %866 = vsyncpa [#allocation5], 1
    %s867 = scalar_lea.sflag [#allocation5], 1
    %868 = vsyncpa %s867, 1
    %869 = vsyncpa [#allocation8], 1
    %s870 = scalar_lea.sflag [#allocation8], 1
    %871 = vsyncpa %s870, 1
    %872 = vsyncpa [#allocation11], 1
    %873 = vsyncpa [#allocation14], 1
    %874 = vsyncpa [#allocation6], 1
    %s875 = scalar_lea.sflag [#allocation6], 1
    %876 = vsyncpa %s875, 1

</llo_original>
